<compile_context>
chip_gen: v7x
topology: tpu7x:2x2x1
jax: 0.10.0
libtpu: 0.0.40
codegen_flags: <defaults>
</compile_context>

<pallas_src>
import math

import jax
import jax.numpy as jnp
from jax.experimental import pallas as pl
from jax.experimental.pallas import tpu as pltpu


def _round_up(x: int, m: int) -> int:
    return ((x + m - 1) // m) * m


def make_embeddings_fn(vocab_size: int, d_model: int, tb_max: int = 512,
                       out_dtype=None):
    """Returns a callable (x_ids:(B,S) int, table:(V,D)) -> (B,S,D)."""
    scale = float(math.sqrt(d_model))

    def _make_kernel(tb: int):
        def embed_kernel(ids_smem, table_hbm, out_ref, row_buf, sem):
            # ids_smem:  SMEM (n_pad,) int32 token ids (scalar-prefetched)
            # table_hbm: HBM  (vocab_size, d_model) embedding table (no auto-DMA)
            # out_ref:   VMEM (tb, d_model) output tile
            # row_buf:   VMEM (tb, d_model) gathered rows scratch
            # sem:       scalar DMA semaphore shared by all row copies
            base = pl.program_id(0) * tb

            # Issue one row-copy DMA per token in this tile (all in flight).
            @pl.loop(0, tb)
            def _(j):
                tok = ids_smem[base + j]
                pltpu.make_async_copy(
                    table_hbm.at[pl.ds(tok, 1)],
                    row_buf.at[pl.ds(j, 1)],
                    sem,
                ).start()

            # Wait for all tb copies (identical size -> same-shaped descriptor).
            @pl.loop(0, tb)
            def _(j):
                pltpu.make_async_copy(
                    table_hbm.at[pl.ds(0, 1)],
                    row_buf.at[pl.ds(0, 1)],
                    sem,
                ).wait()

            out_ref[...] = (row_buf[...].astype(jnp.float32) * scale).astype(
                out_ref.dtype
            )

        return embed_kernel

    def embeddings(x_ids: jax.Array, table: jax.Array) -> jax.Array:
        assert table.shape == (vocab_size, d_model)
        batch, seq = x_ids.shape
        n = batch * seq

        # Tile size: multiple of 8 (f32 sublanes); keep >=2 grid blocks when
        # possible so v7x can shard the token-block axis across its 2 TCs.
        tb = min(tb_max, _round_up(max(pl.cdiv(n, 2), 8), 8))
        n_pad = _round_up(n, tb)

        odtype = jnp.dtype(out_dtype) if out_dtype is not None else table.dtype

        ids_flat = x_ids.reshape(n).astype(jnp.int32)
        # Clamp so a bad token id never produces an out-of-bounds HBM DMA.
        # TODO(synk): nn.Embedding raises on out-of-range ids; this silently clamps.
        ids_flat = jnp.clip(ids_flat, 0, vocab_size - 1)
        if n_pad != n:
            ids_flat = jnp.pad(ids_flat, (0, n_pad - n))

        # Generation-aware VMEM budget: double-buffered output tile + row scratch
        # (the table never enters VMEM) + margin, clamped to device capacity.
        tab_dsize = jnp.dtype(table.dtype).itemsize
        out_tile_bytes = tb * d_model * jnp.dtype(odtype).itemsize
        row_buf_bytes = tb * d_model * tab_dsize
        needed = 2 * out_tile_bytes + row_buf_bytes + (2 << 20)
        try:
            cap = int(pltpu.get_tpu_info().vmem_capacity_bytes)
        except Exception:
            cap = 64 << 20  # conservative (v7x per-TC VMEM)
        vmem_limit = int(min(max(needed, 16 << 20), (cap * 3) // 4))

        out_flat = pl.pallas_call(
            _make_kernel(tb),
            out_shape=jax.ShapeDtypeStruct((n_pad, d_model), odtype),
            grid_spec=pltpu.PrefetchScalarGridSpec(
                # Token ids land in SMEM before the grid runs.
                num_scalar_prefetch=1,
                grid=(n_pad // tb,),
                in_specs=[
                    # Embedding table stays in HBM; rows are DMA-gathered on demand.
                    pl.BlockSpec(memory_space=pl.ANY),
                ],
                out_specs=pl.BlockSpec((tb, d_model), lambda i, ids: (i, 0)),
                scratch_shapes=[
                    pltpu.VMEM((tb, d_model), table.dtype),  # gathered rows
                    pltpu.SemaphoreType.DMA(()),             # shared row-DMA sem
                ],
            ),
            compiler_params=pltpu.CompilerParams(
                # Disjoint output tiles -> token-block axis is truly parallel
                # (lets v7x shard it across its 2 TensorCores).
                dimension_semantics=("parallel",),
                vmem_limit_bytes=vmem_limit,
            ),
        )(ids_flat, table)

        return out_flat[:n].reshape(batch, seq, d_model)

    return embeddings


if __name__ == "__main__":
    # Small shapes consistent with the module's forward.
    vocab_size = 64
    pad_idx = 0
    d_model = 128
    batch, seq = 2, 16

    key = jax.random.PRNGKey(0)
    k_tab, k_ids = jax.random.split(key)

    # nn.Embedding default init ~ N(0, 1); padding_idx row is zeroed.
    table = jax.random.normal(k_tab, (vocab_size, d_model), dtype=jnp.float32)
    table = table.at[pad_idx].set(0.0)

    # Token ids, including some pad tokens.
    x = jax.random.randint(k_ids, (batch, seq), 0, vocab_size, dtype=jnp.int32)
    x = x.at[0, 0].set(pad_idx)

    embeddings = make_embeddings_fn(vocab_size, d_model)
    out = jax.block_until_ready(embeddings(x, table))

    # Reference check in plain JAX (same semantics as the PyTorch forward).
    ref = table[x] * math.sqrt(d_model)
    assert out.shape == (batch, seq, d_model)
    assert jnp.allclose(out, ref, atol=1e-5, rtol=1e-5), float(
        jnp.max(jnp.abs(out - ref))
    )
    assert jnp.all(out[0, 0] == 0.0)  # padding_idx row stays exactly zero

    print("KERNEL_OK")
</pallas_src>

<mosaic_0001>
module attributes {stable_mosaic.version = 11 : i64} {
  func.func @embed_kernel(%arg0: i32, %arg1: memref<32xi32, #tpu.memory_space<smem>>, %arg2: memref<64x128xf32, #tpu.memory_space<any>>, %arg3: memref<16x128xf32, #tpu.memory_space<vmem>>, %arg4: memref<16x128xf32, #tpu.memory_space<vmem>>, %arg5: memref<!tpu.dma_semaphore, #tpu.memory_space<semaphore_mem>>) attributes {dimension_semantics = [#tpu.dimension_semantics<parallel>], iteration_bounds = array<i64: 2>, scalar_prefetch = 1 : i64, scratch_operands = 2 : i64, tpu.core_type = #tpu.core_type<tc>, window_params = [{}, {transform_indices = @transform_1, window_bounds = array<i64: 16, 128>}]} {
    %c16_i32 = arith.constant 16 : i32
    %0 = arith.muli %arg0, %c16_i32 : i32
    %c0_i32 = arith.constant 0 : i32
    %c16_i32_0 = arith.constant 16 : i32
    %1 = arith.addi %c0_i32, %c16_i32_0 : i32
    %c1_i32 = arith.constant 1 : i32
    scf.for %arg6 = %c0_i32 to %1 step %c1_i32  : i32 {
      %c1_i32_8 = arith.constant 1 : i32
      %7 = arith.muli %arg6, %c1_i32_8 : i32
      %c0_i32_9 = arith.constant 0 : i32
      %8 = arith.addi %c0_i32_9, %7 : i32
      %9 = arith.addi %0, %8 : i32
      %10 = arith.index_cast %9 : i32 to index
      %11 = memref.load %arg1[%10] : memref<32xi32, #tpu.memory_space<smem>>
      %c0_i32_10 = arith.constant 0 : i32
      %12 = tpu.memref_slice %arg2[%11, %c0_i32_10] : memref<64x128xf32, #tpu.memory_space<any>> -> memref<1x128xf32, #tpu.memory_space<any>>
      %c0_i32_11 = arith.constant 0 : i32
      %13 = tpu.memref_slice %arg4[%8, %c0_i32_11] : memref<16x128xf32, #tpu.memory_space<vmem>> -> memref<1x128xf32, #tpu.memory_space<vmem>>
      tpu.enqueue_dma source(%12 : memref<1x128xf32, #tpu.memory_space<any>>) target(%13 : memref<1x128xf32, #tpu.memory_space<vmem>>) target_semaphore(%arg5 : memref<!tpu.dma_semaphore, #tpu.memory_space<semaphore_mem>>)
    }
    %c16_i32_1 = arith.constant 16 : i32
    %c0_i32_2 = arith.constant 0 : i32
    %c16_i32_3 = arith.constant 16 : i32
    %2 = arith.addi %c0_i32_2, %c16_i32_3 : i32
    %c1_i32_4 = arith.constant 1 : i32
    scf.for %arg6 = %c0_i32_2 to %2 step %c1_i32_4  : i32 {
      %c0_i32_8 = arith.constant 0 : i32
      %c0_i32_9 = arith.constant 0 : i32
      %7 = tpu.memref_slice %arg2[%c0_i32_8, %c0_i32_9] : memref<64x128xf32, #tpu.memory_space<any>> -> memref<1x128xf32, #tpu.memory_space<any>>
      %c0_i32_10 = arith.constant 0 : i32
      %c0_i32_11 = arith.constant 0 : i32
      %8 = tpu.memref_slice %arg4[%c0_i32_10, %c0_i32_11] : memref<16x128xf32, #tpu.memory_space<vmem>> -> memref<1x128xf32, #tpu.memory_space<vmem>>
      tpu.wait_dma2 semaphore(%arg5 : memref<!tpu.dma_semaphore, #tpu.memory_space<semaphore_mem>>) src(%7 : memref<1x128xf32, #tpu.memory_space<any>>) dst(%8 : memref<1x128xf32, #tpu.memory_space<vmem>>)
    }
    %c0 = arith.constant 0 : index
    %c0_5 = arith.constant 0 : index
    %3 = vector.load %arg4[%c0, %c0_5] : memref<16x128xf32, #tpu.memory_space<vmem>>, vector<16x128xf32>
    %cst = arith.constant 11.3137083 : f32
    %4 = vector.broadcast %cst : f32 to vector<16x128xf32>
    %5 = arith.mulf %3, %4 : vector<16x128xf32>
    %c0_6 = arith.constant 0 : index
    %c0_7 = arith.constant 0 : index
    %6 = vector.load %arg3[%c0_6, %c0_7] : memref<16x128xf32, #tpu.memory_space<vmem>>, vector<16x128xf32>
    tpu.vector_store %arg3[%c0_6, %c0_7], %5 {strides = array<i32>} : memref<16x128xf32, #tpu.memory_space<vmem>>, vector<16x128xf32>,
    return
  }
  func.func @transform_1(%arg0: i32, %arg1: memref<32xi32, #tpu.memory_space<smem>>) -> (i32, i32) {
    %c0_i32 = arith.constant 0 : i32
    %c0_i32_0 = arith.constant 0 : i32
    return %arg0, %c0_i32 : i32, i32
  }
}

</mosaic_0001>

<llo_original>
// kernel: tpu_custom_call.1
$region0: #{tpu_custom_call.1}
  #allocation0 [shape = 'u32[]', space=smem, size = 0x4, offset = 0x4, fixed_abs, tag = 'smem constant byte address 0x4 - core index']
  #allocation1 [shape = 'u32[144,128]{1,0:T(1,128)}', space=vmem, size = 0x12000, scoped, tag = 'internal scratch']
  #allocation2 [shape = 'f32[16,128]{1,0:T(8,128)}', space=vmem, size = 0x2000, scoped, tag = 'scratch operand']
  #allocation3 [shape = 's32[1]{0}', space=sflag, size = 0x4, scoped, tag = 'scratch operand']
  #allocation4 [shape = 's32[1]{0}', space=sflag, size = 0x4, scoped, tag = 'scoped memory for tpu_custom_call.1']
  #allocation5 [shape = 'u8[512]{0}', space=smem, size = 0x200, scoped, tag = 'prefetched SMEM operand 0']
  #allocation8 [shape = 's32[]', space=sflag, size = 0x4, offset = 0, fixed_abs, tag = 'sflag constant byte address 0x0 - dummy sync flag']
  #allocation9 [shape = 's32[]', space=sflag, size = 0x4, offset = 0, fixed_abs, tag = 'sflag constant byte address 0x0 - dummy sync flag']
  #allocation10 [shape = 'u32[]', space=smem, size = 0x4, offset = 0x44, fixed_abs, tag = 'smem constant byte address 0x44 - assertion arg 0']
  #allocation11 [shape = 'u32[]', space=smem, size = 0x4, offset = 0x48, fixed_abs, tag = 'smem constant byte address 0x48 - assertion arg 1']
  %s0 = inlined_call_operand.hbm [shape: s32[32], index: 0, kind: input, shape index: {}]
  %s1 = inlined_call_operand.hbm [shape: f32[64,128], index: 1, kind: input, shape index: {}]
  %s2 = inlined_call_operand.hbm [shape: f32[32,128], index: 2, kind: output, shape index: {}]
  %s3 = sld [smem:[#allocation0]]
  $region43: #{tpu_custom_call.1} parent=0
    _
  %s5 = ssub.s32 1, %s3
  %s6 = scalar_select 0, %s5, %s3
  %8 = dma.hbm_to_smem %s0, 16, [#allocation5], [#allocation4]
  %9 = dma.done [#allocation4], 16
  %10 = sfence
  $region1: #{tpu_custom_call.1} parent=0
    #allocation6 [shape = 'u8[16384]{0}', space=vmem, size = 0x4000, scoped, tag = 'output window, operand 0']
    #allocation7 [shape = 's32[2]{0}', space=sflag, size = 0x8, scoped, tag = 'scoped memory for tpu_custom_call.1']
    %11 = vsyncpa [#allocation7], 0
    %s12 = scalar_lea.sflag [#allocation7], 1
    %13 = vsyncpa %s12, 0
    loop: start=0, step=1, limit=3
    $region2: #{tpu_custom_call.1} parent=1 // loop_pre_header
      _
    $region3: #{tpu_custom_call.1} parent=1 // loop_header
      %s15 = sphi 0, %s19
      %p16 = scmp.ge.s32.totalorder %s15, 3
      %s24 = sphi 0, %s26
      %s27 = sphi 0, %s24
      %s37 = sphi 0, %s27
    $region4: #{tpu_custom_call.1} parent=1 // loop_header_branch
      %18 = sbr.rel (%p16) target = $region8
    $region5: #{tpu_custom_call.1} parent=1 // loop_body
      %s20 = ssub.s32 %s15, 1
      %s21 = sadd.s32 %s15, 1
      %s22 = ssub.s32 %s15, %s21
      %p23 = scmp.eq.s32.totalorder %s22, 0
      %s25 = sadd.s32 %s24, 1
      %s26 = scalar_select %p23, %s24, %s25
      %p28 = pneg %p23
      %p29 = scmp.eq.s32.totalorder %s15, 1
      %p30 = por %p28, %p29
      %p31 = scmp.ne.s32.totalorder %s24, %s27
      %p32 = scmp.eq.s32.totalorder %s15, 0
      %p33 = por %p31, %p32
      %p34 = scmp.ne.s32.totalorder %s24, %s27
      %p35 = scmp.eq.s32.totalorder %s20, 1
      %p36 = por %p34, %p35
      %p38 = scmp.ne.s32.totalorder %s27, %s37
      %p39 = scmp.eq.s32.totalorder %s20, 0
      %p40 = por %p38, %p39
      %p41 = scmp.lt.s32.totalorder %s15, 2
      // Predicated region
      $region9: #{tpu_custom_call.1} parent=5 // pred_check
        %p42 = pneg %p41
      $region10: #{tpu_custom_call.1} parent=5 // pred_check_branch
        %44 = sbr.rel (%p42) target = $region12
      $region11: #{tpu_custom_call.1} parent=5 // pred_region
        %p45 = pneg %p33
        %p46 = pneg %p30
        %s47 = sand.u32 %s24, 1
        %s48 = scalar_lea.sflag [#allocation7], %s47
        %s49 = sand.u32 %s24, 1
        %s50 = smul.addr %s49, 16
        %s51 = scalar_lea.vmem [#allocation6], %s50
        %s52 = smul.u32 2, %s15
        %s53 = smul.u32 %s15, 16
        loop: start=0, step=1, limit=16
        $region13: #{tpu_custom_call.1} parent=11 // loop_pre_header
          _
        $region14: #{tpu_custom_call.1} parent=11 // loop_header
          %s55 = sphi 0, %s59
          %p56 = scmp.ge.s32.totalorder %s55, 16
        $region15: #{tpu_custom_call.1} parent=11 // loop_header_branch
          %58 = sbr.rel (%p56) target = $region19
        $region16: #{tpu_custom_call.1} parent=11 // loop_body
          %s60 = sadd.s32 %s53, %s55
          %s61 = sld [smem:[#allocation5 + %s60]]
          %s62 = smul.addr %s61, 16
          %s63 = scalar_lea.hbm %s1, %s62
          %s64 = scalar_lea.vmem [#allocation2], %s55
          // Predicated region
          $region20: #{tpu_custom_call.1} parent=16 // pred_check
            _
          $region21: #{tpu_custom_call.1} parent=16 // pred_check_branch
            %66 = sbr.rel target = $region23
          $region22: #{tpu_custom_call.1} parent=16 // pred_region
            %67 = sst [smem:[#allocation10]] [#allocation9]
            %68 = sst [smem:[#allocation11]] [#allocation8]
          $region23: #{tpu_custom_call.1} parent=16 // pred_fallthru
            _
          %70 = shalt.err (0)
          %s72 = sshll.u32 %s64, 4
          %s73 = int_to_ptr.vmem [resolvable:$true] %s72
          %75 = dma.hbm_to_vmem [thread:$0]  %s63, 16, %s73, [#allocation3]
        $region17: #{tpu_custom_call.1} parent=11 // loop_footer
          %s59 = sadd.s32 1, %s55
        $region18: #{tpu_custom_call.1} parent=11 // loop_footer_branch
          %54 = sbr.rel target = $region14
        $region19: #{tpu_custom_call.1} parent=11 // loop_exit
          _
        loop: start=0, step=1, limit=16
        $region24: #{tpu_custom_call.1} parent=11 // loop_pre_header
          _
        $region25: #{tpu_custom_call.1} parent=11 // loop_header
          %s77 = sphi 0, %s81
          %p78 = scmp.ge.s32.totalorder %s77, 16
        $region26: #{tpu_custom_call.1} parent=11 // loop_header_branch
          %80 = sbr.rel (%p78) target = $region30
        $region27: #{tpu_custom_call.1} parent=11 // loop_body
          %s82 = smul.u32 1, 1
          %s83 = sshll.u32 %s82, 4
          %84 = dma.done [#allocation3], %s83
        $region28: #{tpu_custom_call.1} parent=11 // loop_footer
          %s81 = sadd.s32 1, %s77
        $region29: #{tpu_custom_call.1} parent=11 // loop_footer_branch
          %76 = sbr.rel target = $region25
        $region30: #{tpu_custom_call.1} parent=11 // loop_exit
          _
        %v85 = vld [vmem:[#allocation2] sm:$0xff]
        %v86 = vld [vmem:[#allocation2 + $0x8] sm:$0xff]
        %v87 = vmul.f32 %v85, 11.313708
        %v88 = vmul.f32 %v86, 11.313708
        %89 = vst [vmem:[%s51] sm:$0xff] %v87
        %90 = vst [vmem:[%s51 + $0x8] sm:$0xff] %v88
        %s91 = sand.u32 %s24, 1
        %s92 = scalar_lea.sflag [#allocation7], %s91
        %s93 = sand.u32 %s24, 1
        %s94 = smul.addr %s93, 16
        %s95 = scalar_lea.vmem [#allocation6], %s94
        // Predicated region
        $region31: #{tpu_custom_call.1} parent=11 // pred_check
          %p96 = pneg %p30
        $region32: #{tpu_custom_call.1} parent=11 // pred_check_branch
          %98 = sbr.rel (%p96) target = $region34
        $region33: #{tpu_custom_call.1} parent=11 // pred_region
          %s99 = smul.u32 2, %s15
          %s101 = ssub.s32 256, 256
          %102 = vsyncadd %s92, %s101
          %s103 = smul.addr %s99, 128
          %s104 = scalar_lea.hbm %s2, %s103
          %s105 = sshll.u32 %s95, 4
          %s106 = int_to_ptr.vmem [resolvable:$true] %s105
          %111 = dma.vmem_to_hbm [thread:$0]  %s106, 256, %s104, %s92, 128, 128, 8
        $region34: #{tpu_custom_call.1} parent=11 // pred_fallthru
          _
      $region12: #{tpu_custom_call.1} parent=5 // pred_fallthru
        _
      %p112 = scmp.le.s32.totalorder 1, %s15
      // Predicated region
      $region35: #{tpu_custom_call.1} parent=5 // pred_check
        %p113 = pneg %p112
      $region36: #{tpu_custom_call.1} parent=5 // pred_check_branch
        %115 = sbr.rel (%p113) target = $region38
      $region37: #{tpu_custom_call.1} parent=5 // pred_region
        %s116 = ssub.s32 %s15, 1
        // Predicated region
        $region39: #{tpu_custom_call.1} parent=37 // pred_check
          %p117 = pneg %p36
        $region40: #{tpu_custom_call.1} parent=37 // pred_check_branch
          %119 = sbr.rel (%p117) target = $region42
        $region41: #{tpu_custom_call.1} parent=37 // pred_region
          %s120 = sand.u32 %s27, 1
          %s121 = scalar_lea.sflag [#allocation7], %s120
          %s122 = sand.u32 %s27, 1
          %s123 = smul.addr %s122, 16
          %s124 = scalar_lea.vmem [#allocation6], %s123
          %125 = dma.done %s121, 256
        $region42: #{tpu_custom_call.1} parent=37 // pred_fallthru
          _
      $region38: #{tpu_custom_call.1} parent=5 // pred_fallthru
        _
    $region6: #{tpu_custom_call.1} parent=1 // loop_footer
      %s19 = sadd.s32 1, %s15
    $region7: #{tpu_custom_call.1} parent=1 // loop_footer_branch
      %14 = sbr.rel target = $region3
    $region8: #{tpu_custom_call.1} parent=1 // loop_exit
      _
    %126 = vsyncpa [#allocation7], 1
    %s127 = scalar_lea.sflag [#allocation7], 1
    %128 = vsyncpa %s127, 1
  %129 = vsyncmov [#allocation3]
  %s130 = vpop.sfrf %129
  %p131 = scmp.eq.s32.totalorder %s130, 0
  %p132 = pneg %p131
  %134 = shalt.err (%p132)

</llo_original>
